<compile_context>
chip_gen: v5e
topology: v5e:2x2
jax: 0.10.0
libtpu: 0.0.40
codegen_flags: <defaults>
</compile_context>

<pallas_src>
import functools

import jax
import jax.numpy as jnp
import numpy as np
from jax.experimental import pallas as pl
from jax.experimental.pallas import tpu as pltpu


def _graphconv_kernel(x_ref, a1_ref, a2_ref, w_ref, b_ref, o_ref, h_ref, *,
                      c_in, order):
    # x_ref : (1, C_in, V*L)   one batch, lanes = (v, l) -> 256 lanes
    # a*_ref: (V*L, V*L)       kron(A, I_L): block-diagonal propagation matrix
    # w_ref : (C_out, C_tot)   1x1-conv weight, C_tot = (order*support_len+1)*C_in
    # b_ref : (C_out, 1)       1x1-conv bias
    # o_ref : (1, C_out, V*L)
    # h_ref : (C_tot, V*L)     VMEM scratch holding the channel-concat blocks
    x0 = x_ref[0]                                            # (C_in, V*L), f32

    # Block 0: identity (the "x" term of the concat).
    h_ref[pl.ds(0, c_in), :] = x0

    blk = 1
    for a_ref in (a1_ref, a2_ref):                           # support_len = 2
        adj = a_ref[...]                                     # (V*L, V*L)
        xk = jnp.dot(x0, adj, preferred_element_type=jnp.float32)   # A x
        h_ref[pl.ds(blk * c_in, c_in), :] = xk
        blk += 1
        for _ in range(2, order + 1):                        # A^k x
            xk = jnp.dot(xk, adj, preferred_element_type=jnp.float32)
            h_ref[pl.ds(blk * c_in, c_in), :] = xk
            blk += 1

    # Fused 1x1 conv: ONE (C_out, C_tot) @ (C_tot, V*L) matmul + bias.
    h = h_ref[...]                                           # (C_tot, V*L)
    out = jnp.dot(w_ref[...], h, preferred_element_type=jnp.float32)
    out = out + b_ref[...]                                   # bias broadcast

    # TODO(synk): F.dropout in training mode omitted; inference (identity) only.
    o_ref[0] = out.astype(o_ref.dtype)


def graph_conv_pallas(x, supports, weight, bias, *, order=2):
    """x: (N, C_in, V, L) float32. supports: tuple of two (V, V) matrices."""
    N, C, V, L = x.shape
    C_out, C_tot = weight.shape
    assert len(supports) == 2, "kernel is specialized for support_len=2"
    assert C_tot == (order * len(supports) + 1) * C

    VL = V * L
    # Contiguous NCHW reshape -> no transpose needed on input or output.
    x_flat = x.reshape(N, C, VL)                             # lanes = (v, l)
    eye_l = jnp.eye(L, dtype=x.dtype)
    # Propagation against kron(A, I_L) keeps the (v, l) lane packing intact:
    #   (x_flat @ kron(A, I_L))[c, w*L + l] == sum_v x[c, v, l] * A[v, w]
    a_hats = [jnp.kron(a, eye_l) for a in supports]          # (V*L, V*L) each
    b2 = bias.reshape(C_out, 1)

    kernel = functools.partial(_graphconv_kernel, c_in=C, order=order)

    out = pl.pallas_call(
        kernel,
        out_shape=jax.ShapeDtypeStruct((N, C_out, VL), jnp.float32),
        grid_spec=pltpu.PrefetchScalarGridSpec(
            num_scalar_prefetch=0,
            grid=(N,),
            in_specs=[
                pl.BlockSpec((1, C, VL), lambda n: (n, 0, 0)),
                pl.BlockSpec((VL, VL), lambda n: (0, 0)),
                pl.BlockSpec((VL, VL), lambda n: (0, 0)),
                pl.BlockSpec((C_out, C_tot), lambda n: (0, 0)),
                pl.BlockSpec((C_out, 1), lambda n: (0, 0)),
            ],
            out_specs=pl.BlockSpec((1, C_out, VL), lambda n: (n, 0, 0)),
            scratch_shapes=[pltpu.VMEM((C_tot, VL), jnp.float32)],
        ),
        compiler_params=pltpu.CompilerParams(
            dimension_semantics=("parallel",)),
    )(x_flat, a_hats[0], a_hats[1], weight, b2)

    return out.reshape(N, C_out, V, L)


def graph_conv_reference(x, supports, weight, bias, *, order=2):
    out = [x]
    for adj in supports:
        x1 = jnp.einsum('ncvl,vw->ncwl', x, adj)
        out.append(x1)
        for _ in range(2, order + 1):
            x1 = jnp.einsum('ncvl,vw->ncwl', x1, adj)
            out.append(x1)
    h = jnp.concatenate(out, axis=1)
    return jnp.einsum('oc,ncvl->novl', weight, h) + bias[None, :, None, None]


if __name__ == "__main__":
    # Module config: c_in=4, c_out=8, dropout=0.3 (identity at inference),
    # support_len=2, order=2  =>  conv input channels = (2*2+1)*4 = 20.
    N, C_IN, V, L = 2, 4, 16, 16
    C_OUT, SUPPORT_LEN, ORDER = 8, 2, 2
    C_TOT = (ORDER * SUPPORT_LEN + 1) * C_IN

    key = jax.random.PRNGKey(0)
    kx, ka1, ka2, kw, kb = jax.random.split(key, 5)

    x = jax.random.normal(kx, (N, C_IN, V, L), dtype=jnp.float32)
    a1 = jax.nn.softmax(jax.random.normal(ka1, (V, V), dtype=jnp.float32), axis=-1)
    a2 = jax.nn.softmax(jax.random.normal(ka2, (V, V), dtype=jnp.float32), axis=-1)
    # Conv2d(c_tot, c_out, kernel_size=(1,1)) parameters (deterministic init).
    weight = 0.1 * jax.random.normal(kw, (C_OUT, C_TOT), dtype=jnp.float32)
    bias = 0.1 * jax.random.normal(kb, (C_OUT,), dtype=jnp.float32)

    out = graph_conv_pallas(x, (a1, a2), weight, bias, order=ORDER)
    out = jax.block_until_ready(out)

    ref = graph_conv_reference(x, (a1, a2), weight, bias, order=ORDER)
    np.testing.assert_allclose(np.asarray(out), np.asarray(ref),
                               rtol=1e-4, atol=1e-4)
    print("KERNEL_OK")
</pallas_src>

<mosaic_0001>
module attributes {stable_mosaic.version = 11 : i64} {
  func.func @_graphconv_kernel(%arg0: i32, %arg1: memref<1x4x256xf32, #tpu.memory_space<vmem>>, %arg2: memref<256x256xf32, #tpu.memory_space<vmem>>, %arg3: memref<256x256xf32, #tpu.memory_space<vmem>>, %arg4: memref<8x20xf32, #tpu.memory_space<vmem>>, %arg5: memref<8x1xf32, #tpu.memory_space<vmem>>, %arg6: memref<1x8x256xf32, #tpu.memory_space<vmem>>, %arg7: memref<20x256xf32, #tpu.memory_space<vmem>>) attributes {dimension_semantics = [#tpu.dimension_semantics<parallel>], iteration_bounds = array<i64: 2>, scalar_prefetch = 0 : i64, scratch_operands = 1 : i64, tpu.core_type = #tpu.core_type<tc>, window_params = [{transform_indices = @transform_0, window_bounds = array<i64: 1, 4, 256>}, {pipeline_mode = #tpu.pipeline_mode<synchronous>, transform_indices = @transform_1, window_bounds = array<i64: 256, 256>}, {pipeline_mode = #tpu.pipeline_mode<synchronous>, transform_indices = @transform_2, window_bounds = array<i64: 256, 256>}, {pipeline_mode = #tpu.pipeline_mode<synchronous>, transform_indices = @transform_3, window_bounds = array<i64: 8, 20>}, {pipeline_mode = #tpu.pipeline_mode<synchronous>, transform_indices = @transform_4, window_bounds = array<i64: 8, 1>}, {transform_indices = @transform_5, window_bounds = array<i64: 1, 8, 256>}]} {
    %c0 = arith.constant 0 : index
    %c0_0 = arith.constant 0 : index
    %c0_1 = arith.constant 0 : index
    %0 = vector.load %arg1[%c0, %c0_0, %c0_1] : memref<1x4x256xf32, #tpu.memory_space<vmem>>, vector<1x4x256xf32>
    %1 = vector.shape_cast %0 : vector<1x4x256xf32> to vector<4x256xf32>
    %c0_2 = arith.constant 0 : index
    %c0_3 = arith.constant 0 : index
    %2 = vector.load %arg7[%c0_2, %c0_3] : memref<20x256xf32, #tpu.memory_space<vmem>>, vector<4x256xf32>
    tpu.vector_store %arg7[%c0_2, %c0_3], %1 {strides = array<i32>} : memref<20x256xf32, #tpu.memory_space<vmem>>, vector<4x256xf32>,
    %c0_4 = arith.constant 0 : index
    %c0_5 = arith.constant 0 : index
    %3 = vector.load %arg2[%c0_4, %c0_5] : memref<256x256xf32, #tpu.memory_space<vmem>>, vector<256x256xf32>
    %cst = arith.constant dense<0.000000e+00> : vector<4x256xf32>
    %4 = tpu.matmul %1, %3, %cst {dimension_numbers = #tpu.dot_dimension_numbers<[1], [0], [0], [1], [0, 0, 1, 1], [], []>} : vector<4x256xf32>, vector<256x256xf32>, vector<4x256xf32> -> vector<4x256xf32>
    %c4 = arith.constant 4 : index
    %c0_6 = arith.constant 0 : index
    %5 = vector.load %arg7[%c4, %c0_6] : memref<20x256xf32, #tpu.memory_space<vmem>>, vector<4x256xf32>
    tpu.vector_store %arg7[%c4, %c0_6], %4 {strides = array<i32>} : memref<20x256xf32, #tpu.memory_space<vmem>>, vector<4x256xf32>,
    %cst_7 = arith.constant dense<0.000000e+00> : vector<4x256xf32>
    %6 = tpu.matmul %4, %3, %cst_7 {dimension_numbers = #tpu.dot_dimension_numbers<[1], [0], [0], [1], [0, 0, 1, 1], [], []>} : vector<4x256xf32>, vector<256x256xf32>, vector<4x256xf32> -> vector<4x256xf32>
    %c8 = arith.constant 8 : index
    %c0_8 = arith.constant 0 : index
    %7 = vector.load %arg7[%c8, %c0_8] : memref<20x256xf32, #tpu.memory_space<vmem>>, vector<4x256xf32>
    tpu.vector_store %arg7[%c8, %c0_8], %6 {strides = array<i32>} : memref<20x256xf32, #tpu.memory_space<vmem>>, vector<4x256xf32>,
    %c0_9 = arith.constant 0 : index
    %c0_10 = arith.constant 0 : index
    %8 = vector.load %arg3[%c0_9, %c0_10] : memref<256x256xf32, #tpu.memory_space<vmem>>, vector<256x256xf32>
    %cst_11 = arith.constant dense<0.000000e+00> : vector<4x256xf32>
    %9 = tpu.matmul %1, %8, %cst_11 {dimension_numbers = #tpu.dot_dimension_numbers<[1], [0], [0], [1], [0, 0, 1, 1], [], []>} : vector<4x256xf32>, vector<256x256xf32>, vector<4x256xf32> -> vector<4x256xf32>
    %c12 = arith.constant 12 : index
    %c0_12 = arith.constant 0 : index
    %10 = vector.load %arg7[%c12, %c0_12] : memref<20x256xf32, #tpu.memory_space<vmem>>, vector<4x256xf32>
    tpu.vector_store %arg7[%c12, %c0_12], %9 {strides = array<i32>} : memref<20x256xf32, #tpu.memory_space<vmem>>, vector<4x256xf32>,
    %cst_13 = arith.constant dense<0.000000e+00> : vector<4x256xf32>
    %11 = tpu.matmul %9, %8, %cst_13 {dimension_numbers = #tpu.dot_dimension_numbers<[1], [0], [0], [1], [0, 0, 1, 1], [], []>} : vector<4x256xf32>, vector<256x256xf32>, vector<4x256xf32> -> vector<4x256xf32>
    %c16 = arith.constant 16 : index
    %c0_14 = arith.constant 0 : index
    %12 = vector.load %arg7[%c16, %c0_14] : memref<20x256xf32, #tpu.memory_space<vmem>>, vector<4x256xf32>
    tpu.vector_store %arg7[%c16, %c0_14], %11 {strides = array<i32>} : memref<20x256xf32, #tpu.memory_space<vmem>>, vector<4x256xf32>,
    %c0_15 = arith.constant 0 : index
    %c0_16 = arith.constant 0 : index
    %13 = vector.load %arg7[%c0_15, %c0_16] : memref<20x256xf32, #tpu.memory_space<vmem>>, vector<20x256xf32>
    %c0_17 = arith.constant 0 : index
    %c0_18 = arith.constant 0 : index
    %14 = vector.load %arg4[%c0_17, %c0_18] : memref<8x20xf32, #tpu.memory_space<vmem>>, vector<8x20xf32>
    %cst_19 = arith.constant dense<0.000000e+00> : vector<8x256xf32>
    %15 = tpu.matmul %14, %13, %cst_19 {dimension_numbers = #tpu.dot_dimension_numbers<[1], [0], [0], [1], [0, 0, 1, 1], [], []>} : vector<8x20xf32>, vector<20x256xf32>, vector<8x256xf32> -> vector<8x256xf32>
    %c0_20 = arith.constant 0 : index
    %c0_21 = arith.constant 0 : index
    %16 = vector.load %arg5[%c0_20, %c0_21] : memref<8x1xf32, #tpu.memory_space<vmem>>, vector<8x1xf32>
    %17 = vector.broadcast %16 : vector<8x1xf32> to vector<8x256xf32>
    %18 = arith.addf %15, %17 : vector<8x256xf32>
    %c0_22 = arith.constant 0 : index
    %c0_23 = arith.constant 0 : index
    %c0_24 = arith.constant 0 : index
    %19 = vector.load %arg6[%c0_22, %c0_23, %c0_24] : memref<1x8x256xf32, #tpu.memory_space<vmem>>, vector<1x8x256xf32>
    %20 = vector.shape_cast %19 : vector<1x8x256xf32> to vector<8x256xf32>
    %21 = vector.shape_cast %18 : vector<8x256xf32> to vector<1x8x256xf32>
    tpu.vector_store %arg6[%c0_22, %c0_23, %c0_24], %21 {strides = array<i32>} : memref<1x8x256xf32, #tpu.memory_space<vmem>>, vector<1x8x256xf32>,
    return
  }
  func.func @transform_0(%arg0: i32) -> (i32, i32, i32) {
    %c0_i32 = arith.constant 0 : i32
    %c0_i32_0 = arith.constant 0 : i32
    %c0_i32_1 = arith.constant 0 : i32
    return %arg0, %c0_i32, %c0_i32_0 : i32, i32, i32
  }
  func.func @transform_1(%arg0: i32) -> (i32, i32) {
    %c0_i32 = arith.constant 0 : i32
    %c0_i32_0 = arith.constant 0 : i32
    %c0_i32_1 = arith.constant 0 : i32
    return %c0_i32, %c0_i32_0 : i32, i32
  }
  func.func @transform_2(%arg0: i32) -> (i32, i32) {
    %c0_i32 = arith.constant 0 : i32
    %c0_i32_0 = arith.constant 0 : i32
    %c0_i32_1 = arith.constant 0 : i32
    return %c0_i32, %c0_i32_0 : i32, i32
  }
  func.func @transform_3(%arg0: i32) -> (i32, i32) {
    %c0_i32 = arith.constant 0 : i32
    %c0_i32_0 = arith.constant 0 : i32
    %c0_i32_1 = arith.constant 0 : i32
    return %c0_i32, %c0_i32_0 : i32, i32
  }
  func.func @transform_4(%arg0: i32) -> (i32, i32) {
    %c0_i32 = arith.constant 0 : i32
    %c0_i32_0 = arith.constant 0 : i32
    %c0_i32_1 = arith.constant 0 : i32
    return %c0_i32, %c0_i32_0 : i32, i32
  }
  func.func @transform_5(%arg0: i32) -> (i32, i32, i32) {
    %c0_i32 = arith.constant 0 : i32
    %c0_i32_0 = arith.constant 0 : i32
    %c0_i32_1 = arith.constant 0 : i32
    return %arg0, %c0_i32, %c0_i32_0 : i32, i32, i32
  }
}

</mosaic_0001>

<llo_original>
// kernel: tpu_custom_call.1
$region0: #{tpu_custom_call.1}
  #allocation0 [shape = 'u32[]', space=smem, size = 0x4, offset = 0x4, fixed_abs, tag = 'smem constant byte address 0x4 - core index']
  #allocation1 [shape = 'u32[72,128]{1,0:T(1,128)}', space=vmem, size = 0x9000, scoped, tag = 'internal scratch']
  #allocation2 [shape = 'f32[20,256]{1,0:T(8,128)}', space=vmem, size = 0x6000, scoped, tag = 'scratch operand']
  %s0 = inlined_call_operand.hbm [shape: f32[2,4,256], index: 0, kind: input, shape index: {}]
  %s1 = inlined_call_operand.hbm [shape: f32[256,256], index: 1, kind: input, shape index: {}]
  %s2 = inlined_call_operand.hbm [shape: f32[256,256], index: 2, kind: input, shape index: {}]
  %s3 = inlined_call_operand.vmem [shape: f32[8,20], index: 3, kind: input, shape index: {}]
  %s4 = inlined_call_operand.vmem [shape: f32[8,1], index: 4, kind: input, shape index: {}]
  %s5 = inlined_call_operand.hbm [shape: f32[2,8,256], index: 5, kind: output, shape index: {}]
  %s6 = sld [smem:[#allocation0]]
  $region65: #{tpu_custom_call.1} parent=0
    _
  %s8 = ssub.s32 1, %s6
  %s9 = scalar_select 0, %s8, %s6
  $region1: #{tpu_custom_call.1} parent=0
    #allocation3 [shape = 'u8[8192]{0}', space=vmem, size = 0x2000, scoped, tag = 'input window, operand 0']
    #allocation4 [shape = 's32[2]{0}', space=sflag, size = 0x8, scoped, tag = 'scoped memory for tpu_custom_call.1']
    #allocation5 [shape = 's32[2]{0}', space=sflag, size = 0x8, scoped, tag = 'scoped memory for tpu_custom_call.1']
    #allocation6 [shape = 'u8[262144]{0}', space=vmem, size = 0x40000, scoped, tag = 'input window, operand 1, single buffered']
    #allocation7 [shape = 's32[1]{0}', space=sflag, size = 0x4, scoped, tag = 'scoped memory for tpu_custom_call.1']
    #allocation8 [shape = 'u8[262144]{0}', space=vmem, size = 0x40000, scoped, tag = 'input window, operand 2, single buffered']
    #allocation9 [shape = 'u8[16384]{0}', space=vmem, size = 0x4000, scoped, tag = 'output window, operand 0']
    %10 = vsyncpa [#allocation4], 0
    %s11 = scalar_lea.sflag [#allocation4], 1
    %12 = vsyncpa %s11, 0
    %13 = vsyncpa [#allocation7], 0
    %14 = vsyncpa [#allocation5], 0
    %s15 = scalar_lea.sflag [#allocation5], 1
    %16 = vsyncpa %s15, 0
    loop: start=0, step=1, limit=4
    $region2: #{tpu_custom_call.1} parent=1 // loop_pre_header
      _
    $region3: #{tpu_custom_call.1} parent=1 // loop_header
      %s18 = sphi 0, %s22
      %p19 = scmp.ge.s32.totalorder %s18, 4
      %s28 = sphi 0, %s30
      %s31 = sphi 0, %s28
      %s32 = sphi 0, %s31
      %s48 = sphi 0, %s32
      %s52 = sphi 0, %s52
      %s54 = sphi 0, %s52
      %s55 = sphi 0, %s54
      %s69 = sphi 0, %s55
      %s73 = sphi 0, %s73
      %s75 = sphi 0, %s73
      %s76 = sphi 0, %s75
      %s90 = sphi 0, %s76
      %s94 = sphi 0, %s94
      %s96 = sphi 0, %s94
      %s97 = sphi 0, %s96
      %s111 = sphi 0, %s97
      %s115 = sphi 0, %s115
      %s117 = sphi 0, %s115
      %s118 = sphi 0, %s117
      %s132 = sphi 0, %s118
      %s138 = sphi 0, %s140
      %s141 = sphi 0, %s138
      %s142 = sphi 0, %s141
      %s158 = sphi 0, %s142
    $region4: #{tpu_custom_call.1} parent=1 // loop_header_branch
      %21 = sbr.rel (%p19) target = $region8
    $region5: #{tpu_custom_call.1} parent=1 // loop_body
      %s23 = ssub.s32 %s18, 1
      %s24 = ssub.s32 %s18, 2
      %s25 = sadd.s32 %s18, 1
      %s26 = ssub.s32 %s18, %s25
      %p27 = scmp.eq.s32.totalorder %s26, 0
      %s29 = sadd.s32 %s28, 1
      %s30 = scalar_select %p27, %s28, %s29
      %p33 = pneg %p27
      %p34 = scmp.eq.s32.totalorder %s18, 1
      %p35 = por %p33, %p34
      %p36 = scmp.ne.s32.totalorder %s28, %s31
      %p37 = scmp.eq.s32.totalorder %s18, 0
      %p38 = por %p36, %p37
      %p39 = scmp.ne.s32.totalorder %s28, %s31
      %p40 = scmp.eq.s32.totalorder %s23, 1
      %p41 = por %p39, %p40
      %p42 = scmp.ne.s32.totalorder %s31, %s32
      %p43 = scmp.eq.s32.totalorder %s23, 0
      %p44 = por %p42, %p43
      %p45 = scmp.ne.s32.totalorder %s31, %s32
      %p46 = scmp.eq.s32.totalorder %s24, 1
      %p47 = por %p45, %p46
      %p49 = scmp.ne.s32.totalorder %s32, %s48
      %p50 = scmp.eq.s32.totalorder %s24, 0
      %p51 = por %p49, %p50
      %s53 = sadd.s32 %s52, 1
      %p56 = scmp.eq.s32.totalorder %s18, 1
      %p57 = scmp.ne.s32.totalorder %s52, %s54
      %p58 = scmp.eq.s32.totalorder %s18, 0
      %p59 = por %p57, %p58
      %p60 = scmp.ne.s32.totalorder %s52, %s54
      %p61 = scmp.eq.s32.totalorder %s23, 1
      %p62 = por %p60, %p61
      %p63 = scmp.ne.s32.totalorder %s54, %s55
      %p64 = scmp.eq.s32.totalorder %s23, 0
      %p65 = por %p63, %p64
      %p66 = scmp.ne.s32.totalorder %s54, %s55
      %p67 = scmp.eq.s32.totalorder %s24, 1
      %p68 = por %p66, %p67
      %p70 = scmp.ne.s32.totalorder %s55, %s69
      %p71 = scmp.eq.s32.totalorder %s24, 0
      %p72 = por %p70, %p71
      %s74 = sadd.s32 %s73, 1
      %p77 = scmp.eq.s32.totalorder %s18, 1
      %p78 = scmp.ne.s32.totalorder %s73, %s75
      %p79 = scmp.eq.s32.totalorder %s18, 0
      %p80 = por %p78, %p79
      %p81 = scmp.ne.s32.totalorder %s73, %s75
      %p82 = scmp.eq.s32.totalorder %s23, 1
      %p83 = por %p81, %p82
      %p84 = scmp.ne.s32.totalorder %s75, %s76
      %p85 = scmp.eq.s32.totalorder %s23, 0
      %p86 = por %p84, %p85
      %p87 = scmp.ne.s32.totalorder %s75, %s76
      %p88 = scmp.eq.s32.totalorder %s24, 1
      %p89 = por %p87, %p88
      %p91 = scmp.ne.s32.totalorder %s76, %s90
      %p92 = scmp.eq.s32.totalorder %s24, 0
      %p93 = por %p91, %p92
      %s95 = sadd.s32 %s94, 1
      %p98 = scmp.eq.s32.totalorder %s18, 1
      %p99 = scmp.ne.s32.totalorder %s94, %s96
      %p100 = scmp.eq.s32.totalorder %s18, 0
      %p101 = por %p99, %p100
      %p102 = scmp.ne.s32.totalorder %s94, %s96
      %p103 = scmp.eq.s32.totalorder %s23, 1
      %p104 = por %p102, %p103
      %p105 = scmp.ne.s32.totalorder %s96, %s97
      %p106 = scmp.eq.s32.totalorder %s23, 0
      %p107 = por %p105, %p106
      %p108 = scmp.ne.s32.totalorder %s96, %s97
      %p109 = scmp.eq.s32.totalorder %s24, 1
      %p110 = por %p108, %p109
      %p112 = scmp.ne.s32.totalorder %s97, %s111
      %p113 = scmp.eq.s32.totalorder %s24, 0
      %p114 = por %p112, %p113
      %s116 = sadd.s32 %s115, 1
      %p119 = scmp.eq.s32.totalorder %s18, 1
      %p120 = scmp.ne.s32.totalorder %s115, %s117
      %p121 = scmp.eq.s32.totalorder %s18, 0
      %p122 = por %p120, %p121
      %p123 = scmp.ne.s32.totalorder %s115, %s117
      %p124 = scmp.eq.s32.totalorder %s23, 1
      %p125 = por %p123, %p124
      %p126 = scmp.ne.s32.totalorder %s117, %s118
      %p127 = scmp.eq.s32.totalorder %s23, 0
      %p128 = por %p126, %p127
      %p129 = scmp.ne.s32.totalorder %s117, %s118
      %p130 = scmp.eq.s32.totalorder %s24, 1
      %p131 = por %p129, %p130
      %p133 = scmp.ne.s32.totalorder %s118, %s132
      %p134 = scmp.eq.s32.totalorder %s24, 0
      %p135 = por %p133, %p134
      %s136 = ssub.s32 %s18, %s25
      %p137 = scmp.eq.s32.totalorder %s136, 0
      %s139 = sadd.s32 %s138, 1
      %s140 = scalar_select %p137, %s138, %s139
      %p143 = pneg %p137
      %p144 = scmp.eq.s32.totalorder %s18, 1
      %p145 = por %p143, %p144
      %p146 = scmp.ne.s32.totalorder %s138, %s141
      %p147 = scmp.eq.s32.totalorder %s18, 0
      %p148 = por %p146, %p147
      %p149 = scmp.ne.s32.totalorder %s138, %s141
      %p150 = scmp.eq.s32.totalorder %s23, 1
      %p151 = por %p149, %p150
      %p152 = scmp.ne.s32.totalorder %s141, %s142
      %p153 = scmp.eq.s32.totalorder %s23, 0
      %p154 = por %p152, %p153
      %p155 = scmp.ne.s32.totalorder %s141, %s142
      %p156 = scmp.eq.s32.totalorder %s24, 1
      %p157 = por %p155, %p156
      %p159 = scmp.ne.s32.totalorder %s142, %s158
      %p160 = scmp.eq.s32.totalorder %s24, 0
      %p161 = por %p159, %p160
      %p162 = scmp.le.s32.totalorder 1, %s18
      %p163 = scmp.lt.s32.totalorder %s18, 3
      %p164 = pnand %p162, %p163
      %p165 = pneg %p164
      // Predicated region
      $region9: #{tpu_custom_call.1} parent=5 // pred_check
        _
      $region10: #{tpu_custom_call.1} parent=5 // pred_check_branch
        %167 = sbr.rel (%p164) target = $region12
      $region11: #{tpu_custom_call.1} parent=5 // pred_region
        %s168 = ssub.s32 %s18, 1
        // Predicated region
        $region13: #{tpu_custom_call.1} parent=11 // pred_check
          %p169 = pneg %p65
        $region14: #{tpu_custom_call.1} parent=11 // pred_check_branch
          %171 = sbr.rel (%p169) target = $region16
        $region15: #{tpu_custom_call.1} parent=11 // pred_region
          %173 = vsyncadd [#allocation7], 0
          %s174 = sshll.u32 %s1, 4
          %s175 = int_to_ptr.hbm [resolvable:$true] %s174
          %s176 = sshll.u32 [#allocation6], 4
          %s177 = int_to_ptr.vmem [resolvable:$true] %s176
          %182 = dma.hbm_to_vmem [thread:$0]  %s175, 8192, %s177, [#allocation7], 256, 256, 16
        $region16: #{tpu_custom_call.1} parent=11 // pred_fallthru
          _
        // Predicated region
        $region17: #{tpu_custom_call.1} parent=11 // pred_check
          %p183 = pneg %p86
        $region18: #{tpu_custom_call.1} parent=11 // pred_check_branch
          %185 = sbr.rel (%p183) target = $region20
        $region19: #{tpu_custom_call.1} parent=11 // pred_region
          %187 = vsyncadd [#allocation7], 0
          %s188 = sshll.u32 %s2, 4
          %s189 = int_to_ptr.hbm [resolvable:$true] %s188
          %s190 = sshll.u32 [#allocation8], 4
          %s191 = int_to_ptr.vmem [resolvable:$true] %s190
          %196 = dma.hbm_to_vmem [thread:$0]  %s189, 8192, %s191, [#allocation7], 256, 256, 16
        $region20: #{tpu_custom_call.1} parent=11 // pred_fallthru
          _
        // Predicated region
        $region21: #{tpu_custom_call.1} parent=11 // pred_check
          %p197 = pneg %p107
        $region22: #{tpu_custom_call.1} parent=11 // pred_check_branch
          %199 = sbr.rel (%p197) target = $region24
        $region23: #{tpu_custom_call.1} parent=11 // pred_region
          _
        $region24: #{tpu_custom_call.1} parent=11 // pred_fallthru
          _
        // Predicated region
        $region25: #{tpu_custom_call.1} parent=11 // pred_check
          %p200 = pneg %p128
        $region26: #{tpu_custom_call.1} parent=11 // pred_check_branch
          %202 = sbr.rel (%p200) target = $region28
        $region27: #{tpu_custom_call.1} parent=11 // pred_region
          _
        $region28: #{tpu_custom_call.1} parent=11 // pred_fallthru
          _
      $region12: #{tpu_custom_call.1} parent=5 // pred_fallthru
        _
      %p203 = scmp.lt.s32.totalorder %s18, 2
      // Predicated region
      $region29: #{tpu_custom_call.1} parent=5 // pred_check
        %p204 = pneg %p203
      $region30: #{tpu_custom_call.1} parent=5 // pred_check_branch
        %206 = sbr.rel (%p204) target = $region32
      $region31: #{tpu_custom_call.1} parent=5 // pred_region
        // Predicated region
        $region33: #{tpu_custom_call.1} parent=31 // pred_check
          %p207 = pneg %p38
        $region34: #{tpu_custom_call.1} parent=31 // pred_check_branch
          %209 = sbr.rel (%p207) target = $region36
        $region35: #{tpu_custom_call.1} parent=31 // pred_region
          %s210 = sand.u32 %s28, 1
          %s211 = scalar_lea.sflag [#allocation4], %s210
          %s212 = sand.u32 %s28, 1
          %s213 = smul.addr %s212, 8
          %s214 = scalar_lea.vmem [#allocation3], %s213
          %216 = vsyncadd %s211, 0
          %s217 = smul.addr %s18, 2
          %s218 = smul.addr %s217, 4
          %s219 = scalar_lea.hbm %s0, %s218
          %s221 = sshll.u32 %s219, 4
          %s222 = int_to_ptr.hbm [resolvable:$true] %s221
          %s223 = sshll.u32 %s214, 4
          %s224 = int_to_ptr.vmem [resolvable:$true] %s223
          %226 = dma.hbm_to_vmem [thread:$0]  %s222, 128, %s224, %s211
        $region36: #{tpu_custom_call.1} parent=31 // pred_fallthru
          _
      $region32: #{tpu_custom_call.1} parent=5 // pred_fallthru
        _
      %p227 = scmp.le.s32.totalorder 1, %s18
      %p228 = scmp.lt.s32.totalorder %s18, 3
      %p229 = pnand %p227, %p228
      %p230 = pneg %p229
      // Predicated region
      $region37: #{tpu_custom_call.1} parent=5 // pred_check
        _
      $region38: #{tpu_custom_call.1} parent=5 // pred_check_branch
        %232 = sbr.rel (%p229) target = $region40
      $region39: #{tpu_custom_call.1} parent=5 // pred_region
        %s233 = ssub.s32 %s18, 1
        %s234 = sand.u32 %s31, 1
        %s235 = scalar_lea.sflag [#allocation4], %s234
        %s236 = sand.u32 %s31, 1
        %s237 = smul.addr %s236, 8
        %s238 = scalar_lea.vmem [#allocation3], %s237
        // Predicated region
        $region41: #{tpu_custom_call.1} parent=39 // pred_check
          %p239 = pneg %p44
        $region42: #{tpu_custom_call.1} parent=39 // pred_check_branch
          %241 = sbr.rel (%p239) target = $region44
        $region43: #{tpu_custom_call.1} parent=39 // pred_region
          %243 = dma.done %s235, 128
        $region44: #{tpu_custom_call.1} parent=39 // pred_fallthru
          _
        // Predicated region
        $region45: #{tpu_custom_call.1} parent=39 // pred_check
          %p244 = pneg %p65
        $region46: #{tpu_custom_call.1} parent=39 // pred_check_branch
          %246 = sbr.rel (%p244) target = $region48
        $region47: #{tpu_custom_call.1} parent=39 // pred_region
          %248 = dma.done [#allocation7], 8192
        $region48: #{tpu_custom_call.1} parent=39 // pred_fallthru
          _
        // Predicated region
        $region49: #{tpu_custom_call.1} parent=39 // pred_check
          %p249 = pneg %p86
        $region50: #{tpu_custom_call.1} parent=39 // pred_check_branch
          %251 = sbr.rel (%p249) target = $region52
        $region51: #{tpu_custom_call.1} parent=39 // pred_region
          %253 = dma.done [#allocation7], 8192
        $region52: #{tpu_custom_call.1} parent=39 // pred_fallthru
          _
        %s254 = sand.u32 %s31, 1
        %s255 = scalar_lea.sflag [#allocation4], %s254
        %s256 = sand.u32 %s31, 1
        %s257 = smul.addr %s256, 8
        %s258 = scalar_lea.vmem [#allocation3], %s257
        %p259 = pneg %p44
        %p260 = pneg %p41
        %p261 = pneg %p65
        %p262 = pneg %p62
        %p263 = pneg %p86
        %p264 = pneg %p83
        %p265 = pneg %p107
        %p266 = pneg %p104
        %p267 = pneg %p128
        %p268 = pneg %p125
        %p269 = pneg %p154
        %p270 = pneg %p151
        %s271 = sand.u32 %s141, 1
        %s272 = scalar_lea.sflag [#allocation5], %s271
        %s273 = sand.u32 %s141, 1
        %s274 = smul.addr %s273, 16
        %s275 = scalar_lea.vmem [#allocation9], %s274
        %v276 = vld [vmem:[%s238] sm:$0xff]
        %278 = vst [vmem:[#allocation1] ss:$2 sm:$0xff] %v276
        %v279 = vld.sshfl [vmem:[#allocation1] sm:$0xff pattern:$0x75316420]
        %v280 = vld.sshfl [vmem:[#allocation1 + $0x8] sm:$0xff pattern:$0x75316420]
        %283 = vst [vmem:[#allocation2] sm:$0xf] %v279
        %284 = vst [vmem:[#allocation2 + $0x8] sm:$0xf] %v280
        %v285 = vld [vmem:[#allocation6] sm:$0xff]
        %v286 = vld [vmem:[#allocation6 + $0x8] sm:$0xff]
        %v287 = vld [vmem:[#allocation6 + $0x10] sm:$0xff]
        %v288 = vld [vmem:[#allocation6 + $0x18] sm:$0xff]
        %v289 = vld [vmem:[#allocation6 + $0x20] sm:$0xff]
        %v290 = vld [vmem:[#allocation6 + $0x28] sm:$0xff]
        %v291 = vld [vmem:[#allocation6 + $0x30] sm:$0xff]
        %v292 = vld [vmem:[#allocation6 + $0x38] sm:$0xff]
        %v293 = vld [vmem:[#allocation6 + $0x40] sm:$0xff]
        %v294 = vld [vmem:[#allocation6 + $0x48] sm:$0xff]
        %v295 = vld [vmem:[#allocation6 + $0x50] sm:$0xff]
        %v296 = vld [vmem:[#allocation6 + $0x58] sm:$0xff]
        %v297 = vld [vmem:[#allocation6 + $0x60] sm:$0xff]
        %v298 = vld [vmem:[#allocation6 + $0x68] sm:$0xff]
        %v299 = vld [vmem:[#allocation6 + $0x70] sm:$0xff]
        %v300 = vld [vmem:[#allocation6 + $0x78] sm:$0xff]
        %v301 = vld [vmem:[#allocation6 + $0x80] sm:$0xff]
        %v302 = vld [vmem:[#allocation6 + $0x88] sm:$0xff]
        %v303 = vld [vmem:[#allocation6 + $0x90] sm:$0xff]
        %v304 = vld [vmem:[#allocation6 + $0x98] sm:$0xff]
        %v305 = vld [vmem:[#allocation6 + $0xa0] sm:$0xff]
        %v306 = vld [vmem:[#allocation6 + $0xa8] sm:$0xff]
        %v307 = vld [vmem:[#allocation6 + $0xb0] sm:$0xff]
        %v308 = vld [vmem:[#allocation6 + $0xb8] sm:$0xff]
        %v309 = vld [vmem:[#allocation6 + $0xc0] sm:$0xff]
        %v310 = vld [vmem:[#allocation6 + $0xc8] sm:$0xff]
        %v311 = vld [vmem:[#allocation6 + $0xd0] sm:$0xff]
        %v312 = vld [vmem:[#allocation6 + $0xd8] sm:$0xff]
        %v313 = vld [vmem:[#allocation6 + $0xe0] sm:$0xff]
        %v314 = vld [vmem:[#allocation6 + $0xe8] sm:$0xff]
        %v315 = vld [vmem:[#allocation6 + $0xf0] sm:$0xff]
        %v316 = vld [vmem:[#allocation6 + $0xf8] sm:$0xff]
        %v317 = vld [vmem:[#allocation6 + $0x100] sm:$0xff]
        %v318 = vld [vmem:[#allocation6 + $0x108] sm:$0xff]
        %v319 = vld [vmem:[#allocation6 + $0x110] sm:$0xff]
        %v320 = vld [vmem:[#allocation6 + $0x118] sm:$0xff]
        %v321 = vld [vmem:[#allocation6 + $0x120] sm:$0xff]
        %v322 = vld [vmem:[#allocation6 + $0x128] sm:$0xff]
        %v323 = vld [vmem:[#allocation6 + $0x130] sm:$0xff]
        %v324 = vld [vmem:[#allocation6 + $0x138] sm:$0xff]
        %v325 = vld [vmem:[#allocation6 + $0x140] sm:$0xff]
        %v326 = vld [vmem:[#allocation6 + $0x148] sm:$0xff]
        %v327 = vld [vmem:[#allocation6 + $0x150] sm:$0xff]
        %v328 = vld [vmem:[#allocation6 + $0x158] sm:$0xff]
        %v329 = vld [vmem:[#allocation6 + $0x160] sm:$0xff]
        %v330 = vld [vmem:[#allocation6 + $0x168] sm:$0xff]
        %v331 = vld [vmem:[#allocation6 + $0x170] sm:$0xff]
        %v332 = vld [vmem:[#allocation6 + $0x178] sm:$0xff]
        %v333 = vld [vmem:[#allocation6 + $0x180] sm:$0xff]
        %v334 = vld [vmem:[#allocation6 + $0x188] sm:$0xff]
        %v335 = vld [vmem:[#allocation6 + $0x190] sm:$0xff]
        %v336 = vld [vmem:[#allocation6 + $0x198] sm:$0xff]
        %v337 = vld [vmem:[#allocation6 + $0x1a0] sm:$0xff]
        %v338 = vld [vmem:[#allocation6 + $0x1a8] sm:$0xff]
        %v339 = vld [vmem:[#allocation6 + $0x1b0] sm:$0xff]
        %v340 = vld [vmem:[#allocation6 + $0x1b8] sm:$0xff]
        %v341 = vld [vmem:[#allocation6 + $0x1c0] sm:$0xff]
        %v342 = vld [vmem:[#allocation6 + $0x1c8] sm:$0xff]
        %v343 = vld [vmem:[#allocation6 + $0x1d0] sm:$0xff]
        %v344 = vld [vmem:[#allocation6 + $0x1d8] sm:$0xff]
        %v345 = vld [vmem:[#allocation6 + $0x1e0] sm:$0xff]
        %v346 = vld [vmem:[#allocation6 + $0x1e8] sm:$0xff]
        %v347 = vld [vmem:[#allocation6 + $0x1f0] sm:$0xff]
        %v348 = vld [vmem:[#allocation6 + $0x1f8] sm:$0xff]
        %349 = vst [vmem:[#allocation1] ss:$2 sm:$0xff] %v276
        %v350 = vld.sshfl [vmem:[#allocation1] sm:$0xff pattern:$0x75316420]
        %v351 = vld.sshfl [vmem:[#allocation1 + $0x8] sm:$0xff pattern:$0x75316420]
        %354 = vmatpush.msra.mxu0 %v315
        %355 = vmatpush.msra.mxu0 %v313
        %356 = vmatpush.msra.mxu0 %v311
        %357 = vmatpush.msra.mxu0 %v309
        %358 = vmatpush.msra.mxu0 %v307
        %359 = vmatpush.msra.mxu0 %v305
        %360 = vmatpush.msra.mxu0 %v303
        %361 = vmatpush.msra.mxu0 %v301
        %362 = vmatpush.msra.mxu0 %v299
        %363 = vmatpush.msra.mxu0 %v297
        %364 = vmatpush.msra.mxu0 %v295
        %365 = vmatpush.msra.mxu0 %v293
        %366 = vmatpush.msra.mxu0 %v291
        %367 = vmatpush.msra.mxu0 %v289
        %368 = vmatpush.msra.mxu0 %v287
        %369 = vmatpush.msra.mxu0 %v285
        %370 = vmatmul.f32.gmra.mxu0 %v350
        %v371 = vpop.f32.mrf.mxu0
        %v372 = vadd.f32 0.0, %v371
        %373 = vdwg.mxu0
        %374 = vmatpush.msra.mxu0 %v347
        %375 = vmatpush.msra.mxu0 %v345
        %376 = vmatpush.msra.mxu0 %v343
        %377 = vmatpush.msra.mxu0 %v341
        %378 = vmatpush.msra.mxu0 %v339
        %379 = vmatpush.msra.mxu0 %v337
        %380 = vmatpush.msra.mxu0 %v335
        %381 = vmatpush.msra.mxu0 %v333
        %382 = vmatpush.msra.mxu0 %v331
        %383 = vmatpush.msra.mxu0 %v329
        %384 = vmatpush.msra.mxu0 %v327
        %385 = vmatpush.msra.mxu0 %v325
        %386 = vmatpush.msra.mxu0 %v323
        %387 = vmatpush.msra.mxu0 %v321
        %388 = vmatpush.msra.mxu0 %v319
        %389 = vmatpush.msra.mxu0 %v317
        %390 = vmatmul.f32.gmra.mxu0 %v351
        %v391 = vpop.f32.mrf.mxu0
        %v392 = vadd.f32 %v372, %v391
        %393 = vdwg.mxu0
        %394 = vmatpush.msra.mxu0 %v316
        %395 = vmatpush.msra.mxu0 %v314
        %396 = vmatpush.msra.mxu0 %v312
        %397 = vmatpush.msra.mxu0 %v310
        %398 = vmatpush.msra.mxu0 %v308
        %399 = vmatpush.msra.mxu0 %v306
        %400 = vmatpush.msra.mxu0 %v304
        %401 = vmatpush.msra.mxu0 %v302
        %402 = vmatpush.msra.mxu0 %v300
        %403 = vmatpush.msra.mxu0 %v298
        %404 = vmatpush.msra.mxu0 %v296
        %405 = vmatpush.msra.mxu0 %v294
        %406 = vmatpush.msra.mxu0 %v292
        %407 = vmatpush.msra.mxu0 %v290
        %408 = vmatpush.msra.mxu0 %v288
        %409 = vmatpush.msra.mxu0 %v286
        %410 = vmatmul.f32.gmra.mxu0 %v350
        %v411 = vpop.f32.mrf.mxu0
        %v412 = vadd.f32 0.0, %v411
        %413 = vdwg.mxu0
        %414 = vmatpush.msra.mxu0 %v348
        %415 = vmatpush.msra.mxu0 %v346
        %416 = vmatpush.msra.mxu0 %v344
        %417 = vmatpush.msra.mxu0 %v342
        %418 = vmatpush.msra.mxu0 %v340
        %419 = vmatpush.msra.mxu0 %v338
        %420 = vmatpush.msra.mxu0 %v336
        %421 = vmatpush.msra.mxu0 %v334
        %422 = vmatpush.msra.mxu0 %v332
        %423 = vmatpush.msra.mxu0 %v330
        %424 = vmatpush.msra.mxu0 %v328
        %425 = vmatpush.msra.mxu0 %v326
        %426 = vmatpush.msra.mxu0 %v324
        %427 = vmatpush.msra.mxu0 %v322
        %428 = vmatpush.msra.mxu0 %v320
        %429 = vmatpush.msra.mxu0 %v318
        %430 = vmatmul.f32.gmra.mxu0 %v351
        %v431 = vpop.f32.mrf.mxu0
        %v432 = vadd.f32 %v412, %v431
        %433 = vdwg.mxu0
        %v436 = vrot.slane %v392, 4
        %v437 = vrot.slane %v432, 4
        %440 = vst [vmem:[#allocation2] sm:$0xf0] %v436
        %441 = vst [vmem:[#allocation2 + $0x8] sm:$0xf0] %v437
        %442 = vmatpush.msra.mxu0 %v315
        %443 = vmatpush.msra.mxu0 %v313
        %444 = vmatpush.msra.mxu0 %v311
        %445 = vmatpush.msra.mxu0 %v309
        %446 = vmatpush.msra.mxu0 %v307
        %447 = vmatpush.msra.mxu0 %v305
        %448 = vmatpush.msra.mxu0 %v303
        %449 = vmatpush.msra.mxu0 %v301
        %450 = vmatpush.msra.mxu0 %v299
        %451 = vmatpush.msra.mxu0 %v297
        %452 = vmatpush.msra.mxu0 %v295
        %453 = vmatpush.msra.mxu0 %v293
        %454 = vmatpush.msra.mxu0 %v291
        %455 = vmatpush.msra.mxu0 %v289
        %456 = vmatpush.msra.mxu0 %v287
        %457 = vmatpush.msra.mxu0 %v285
        %458 = vmatmul.f32.gmra.mxu0 %v392
        %v459 = vpop.f32.mrf.mxu0
        %v460 = vadd.f32 0.0, %v459
        %461 = vdwg.mxu0
        %462 = vmatpush.msra.mxu0 %v347
        %463 = vmatpush.msra.mxu0 %v345
        %464 = vmatpush.msra.mxu0 %v343
        %465 = vmatpush.msra.mxu0 %v341
        %466 = vmatpush.msra.mxu0 %v339
        %467 = vmatpush.msra.mxu0 %v337
        %468 = vmatpush.msra.mxu0 %v335
        %469 = vmatpush.msra.mxu0 %v333
        %470 = vmatpush.msra.mxu0 %v331
        %471 = vmatpush.msra.mxu0 %v329
        %472 = vmatpush.msra.mxu0 %v327
        %473 = vmatpush.msra.mxu0 %v325
        %474 = vmatpush.msra.mxu0 %v323
        %475 = vmatpush.msra.mxu0 %v321
        %476 = vmatpush.msra.mxu0 %v319
        %477 = vmatpush.msra.mxu0 %v317
        %478 = vmatmul.f32.gmra.mxu0 %v432
        %v479 = vpop.f32.mrf.mxu0
        %v480 = vadd.f32 %v460, %v479
        %481 = vdwg.mxu0
        %482 = vmatpush.msra.mxu0 %v316
        %483 = vmatpush.msra.mxu0 %v314
        %484 = vmatpush.msra.mxu0 %v312
        %485 = vmatpush.msra.mxu0 %v310
        %486 = vmatpush.msra.mxu0 %v308
        %487 = vmatpush.msra.mxu0 %v306
        %488 = vmatpush.msra.mxu0 %v304
        %489 = vmatpush.msra.mxu0 %v302
        %490 = vmatpush.msra.mxu0 %v300
        %491 = vmatpush.msra.mxu0 %v298
        %492 = vmatpush.msra.mxu0 %v296
        %493 = vmatpush.msra.mxu0 %v294
        %494 = vmatpush.msra.mxu0 %v292
        %495 = vmatpush.msra.mxu0 %v290
        %496 = vmatpush.msra.mxu0 %v288
        %497 = vmatpush.msra.mxu0 %v286
        %498 = vmatmul.f32.gmra.mxu0 %v392
        %v499 = vpop.f32.mrf.mxu0
        %v500 = vadd.f32 0.0, %v499
        %501 = vdwg.mxu0
        %502 = vmatpush.msra.mxu0 %v348
        %503 = vmatpush.msra.mxu0 %v346
        %504 = vmatpush.msra.mxu0 %v344
        %505 = vmatpush.msra.mxu0 %v342
        %506 = vmatpush.msra.mxu0 %v340
        %507 = vmatpush.msra.mxu0 %v338
        %508 = vmatpush.msra.mxu0 %v336
        %509 = vmatpush.msra.mxu0 %v334
        %510 = vmatpush.msra.mxu0 %v332
        %511 = vmatpush.msra.mxu0 %v330
        %512 = vmatpush.msra.mxu0 %v328
        %513 = vmatpush.msra.mxu0 %v326
        %514 = vmatpush.msra.mxu0 %v324
        %515 = vmatpush.msra.mxu0 %v322
        %516 = vmatpush.msra.mxu0 %v320
        %517 = vmatpush.msra.mxu0 %v318
        %518 = vmatmul.f32.gmra.mxu0 %v432
        %v519 = vpop.f32.mrf.mxu0
        %v520 = vadd.f32 %v500, %v519
        %521 = vdwg.mxu0
        %522 = vst [vmem:[#allocation2 + $0x10] sm:$0xf] %v480
        %523 = vst [vmem:[#allocation2 + $0x18] sm:$0xf] %v520
        %v524 = vld [vmem:[#allocation8] sm:$0xff]
        %v525 = vld [vmem:[#allocation8 + $0x8] sm:$0xff]
        %v526 = vld [vmem:[#allocation8 + $0x10] sm:$0xff]
        %v527 = vld [vmem:[#allocation8 + $0x18] sm:$0xff]
        %v528 = vld [vmem:[#allocation8 + $0x20] sm:$0xff]
        %v529 = vld [vmem:[#allocation8 + $0x28] sm:$0xff]
        %v530 = vld [vmem:[#allocation8 + $0x30] sm:$0xff]
        %v531 = vld [vmem:[#allocation8 + $0x38] sm:$0xff]
        %v532 = vld [vmem:[#allocation8 + $0x40] sm:$0xff]
        %v533 = vld [vmem:[#allocation8 + $0x48] sm:$0xff]
        %v534 = vld [vmem:[#allocation8 + $0x50] sm:$0xff]
        %v535 = vld [vmem:[#allocation8 + $0x58] sm:$0xff]
        %v536 = vld [vmem:[#allocation8 + $0x60] sm:$0xff]
        %v537 = vld [vmem:[#allocation8 + $0x68] sm:$0xff]
        %v538 = vld [vmem:[#allocation8 + $0x70] sm:$0xff]
        %v539 = vld [vmem:[#allocation8 + $0x78] sm:$0xff]
        %v540 = vld [vmem:[#allocation8 + $0x80] sm:$0xff]
        %v541 = vld [vmem:[#allocation8 + $0x88] sm:$0xff]
        %v542 = vld [vmem:[#allocation8 + $0x90] sm:$0xff]
        %v543 = vld [vmem:[#allocation8 + $0x98] sm:$0xff]
        %v544 = vld [vmem:[#allocation8 + $0xa0] sm:$0xff]
        %v545 = vld [vmem:[#allocation8 + $0xa8] sm:$0xff]
        %v546 = vld [vmem:[#allocation8 + $0xb0] sm:$0xff]
        %v547 = vld [vmem:[#allocation8 + $0xb8] sm:$0xff]
        %v548 = vld [vmem:[#allocation8 + $0xc0] sm:$0xff]
        %v549 = vld [vmem:[#allocation8 + $0xc8] sm:$0xff]
        %v550 = vld [vmem:[#allocation8 + $0xd0] sm:$0xff]
        %v551 = vld [vmem:[#allocation8 + $0xd8] sm:$0xff]
        %v552 = vld [vmem:[#allocation8 + $0xe0] sm:$0xff]
        %v553 = vld [vmem:[#allocation8 + $0xe8] sm:$0xff]
        %v554 = vld [vmem:[#allocation8 + $0xf0] sm:$0xff]
        %v555 = vld [vmem:[#allocation8 + $0xf8] sm:$0xff]
        %v556 = vld [vmem:[#allocation8 + $0x100] sm:$0xff]
        %v557 = vld [vmem:[#allocation8 + $0x108] sm:$0xff]
        %v558 = vld [vmem:[#allocation8 + $0x110] sm:$0xff]
        %v559 = vld [vmem:[#allocation8 + $0x118] sm:$0xff]
        %v560 = vld [vmem:[#allocation8 + $0x120] sm:$0xff]
        %v561 = vld [vmem:[#allocation8 + $0x128] sm:$0xff]
        %v562 = vld [vmem:[#allocation8 + $0x130] sm:$0xff]
        %v563 = vld [vmem:[#allocation8 + $0x138] sm:$0xff]
        %v564 = vld [vmem:[#allocation8 + $0x140] sm:$0xff]
        %v565 = vld [vmem:[#allocation8 + $0x148] sm:$0xff]
        %v566 = vld [vmem:[#allocation8 + $0x150] sm:$0xff]
        %v567 = vld [vmem:[#allocation8 + $0x158] sm:$0xff]
        %v568 = vld [vmem:[#allocation8 + $0x160] sm:$0xff]
        %v569 = vld [vmem:[#allocation8 + $0x168] sm:$0xff]
        %v570 = vld [vmem:[#allocation8 + $0x170] sm:$0xff]
        %v571 = vld [vmem:[#allocation8 + $0x178] sm:$0xff]
        %v572 = vld [vmem:[#allocation8 + $0x180] sm:$0xff]
        %v573 = vld [vmem:[#allocation8 + $0x188] sm:$0xff]
        %v574 = vld [vmem:[#allocation8 + $0x190] sm:$0xff]
        %v575 = vld [vmem:[#allocation8 + $0x198] sm:$0xff]
        %v576 = vld [vmem:[#allocation8 + $0x1a0] sm:$0xff]
        %v577 = vld [vmem:[#allocation8 + $0x1a8] sm:$0xff]
        %v578 = vld [vmem:[#allocation8 + $0x1b0] sm:$0xff]
        %v579 = vld [vmem:[#allocation8 + $0x1b8] sm:$0xff]
        %v580 = vld [vmem:[#allocation8 + $0x1c0] sm:$0xff]
        %v581 = vld [vmem:[#allocation8 + $0x1c8] sm:$0xff]
        %v582 = vld [vmem:[#allocation8 + $0x1d0] sm:$0xff]
        %v583 = vld [vmem:[#allocation8 + $0x1d8] sm:$0xff]
        %v584 = vld [vmem:[#allocation8 + $0x1e0] sm:$0xff]
        %v585 = vld [vmem:[#allocation8 + $0x1e8] sm:$0xff]
        %v586 = vld [vmem:[#allocation8 + $0x1f0] sm:$0xff]
        %v587 = vld [vmem:[#allocation8 + $0x1f8] sm:$0xff]
        %588 = vst [vmem:[#allocation1] ss:$2 sm:$0xff] %v276
        %v589 = vld.sshfl [vmem:[#allocation1] sm:$0xff pattern:$0x75316420]
        %v590 = vld.sshfl [vmem:[#allocation1 + $0x8] sm:$0xff pattern:$0x75316420]
        %593 = vmatpush.msra.mxu0 %v554
        %594 = vmatpush.msra.mxu0 %v552
        %595 = vmatpush.msra.mxu0 %v550
        %596 = vmatpush.msra.mxu0 %v548
        %597 = vmatpush.msra.mxu0 %v546
        %598 = vmatpush.msra.mxu0 %v544
        %599 = vmatpush.msra.mxu0 %v542
        %600 = vmatpush.msra.mxu0 %v540
        %601 = vmatpush.msra.mxu0 %v538
        %602 = vmatpush.msra.mxu0 %v536
        %603 = vmatpush.msra.mxu0 %v534
        %604 = vmatpush.msra.mxu0 %v532
        %605 = vmatpush.msra.mxu0 %v530
        %606 = vmatpush.msra.mxu0 %v528
        %607 = vmatpush.msra.mxu0 %v526
        %608 = vmatpush.msra.mxu0 %v524
        %609 = vmatmul.f32.gmra.mxu0 %v589
        %v610 = vpop.f32.mrf.mxu0
        %v611 = vadd.f32 0.0, %v610
        %612 = vdwg.mxu0
        %613 = vmatpush.msra.mxu0 %v586
        %614 = vmatpush.msra.mxu0 %v584
        %615 = vmatpush.msra.mxu0 %v582
        %616 = vmatpush.msra.mxu0 %v580
        %617 = vmatpush.msra.mxu0 %v578
        %618 = vmatpush.msra.mxu0 %v576
        %619 = vmatpush.msra.mxu0 %v574
        %620 = vmatpush.msra.mxu0 %v572
        %621 = vmatpush.msra.mxu0 %v570
        %622 = vmatpush.msra.mxu0 %v568
        %623 = vmatpush.msra.mxu0 %v566
        %624 = vmatpush.msra.mxu0 %v564
        %625 = vmatpush.msra.mxu0 %v562
        %626 = vmatpush.msra.mxu0 %v560
        %627 = vmatpush.msra.mxu0 %v558
        %628 = vmatpush.msra.mxu0 %v556
        %629 = vmatmul.f32.gmra.mxu0 %v590
        %v630 = vpop.f32.mrf.mxu0
        %v631 = vadd.f32 %v611, %v630
        %632 = vdwg.mxu0
        %633 = vmatpush.msra.mxu0 %v555
        %634 = vmatpush.msra.mxu0 %v553
        %635 = vmatpush.msra.mxu0 %v551
        %636 = vmatpush.msra.mxu0 %v549
        %637 = vmatpush.msra.mxu0 %v547
        %638 = vmatpush.msra.mxu0 %v545
        %639 = vmatpush.msra.mxu0 %v543
        %640 = vmatpush.msra.mxu0 %v541
        %641 = vmatpush.msra.mxu0 %v539
        %642 = vmatpush.msra.mxu0 %v537
        %643 = vmatpush.msra.mxu0 %v535
        %644 = vmatpush.msra.mxu0 %v533
        %645 = vmatpush.msra.mxu0 %v531
        %646 = vmatpush.msra.mxu0 %v529
        %647 = vmatpush.msra.mxu0 %v527
        %648 = vmatpush.msra.mxu0 %v525
        %649 = vmatmul.f32.gmra.mxu0 %v589
        %v650 = vpop.f32.mrf.mxu0
        %v651 = vadd.f32 0.0, %v650
        %652 = vdwg.mxu0
        %653 = vmatpush.msra.mxu0 %v587
        %654 = vmatpush.msra.mxu0 %v585
        %655 = vmatpush.msra.mxu0 %v583
        %656 = vmatpush.msra.mxu0 %v581
        %657 = vmatpush.msra.mxu0 %v579
        %658 = vmatpush.msra.mxu0 %v577
        %659 = vmatpush.msra.mxu0 %v575
        %660 = vmatpush.msra.mxu0 %v573
        %661 = vmatpush.msra.mxu0 %v571
        %662 = vmatpush.msra.mxu0 %v569
        %663 = vmatpush.msra.mxu0 %v567
        %664 = vmatpush.msra.mxu0 %v565
        %665 = vmatpush.msra.mxu0 %v563
        %666 = vmatpush.msra.mxu0 %v561
        %667 = vmatpush.msra.mxu0 %v559
        %668 = vmatpush.msra.mxu0 %v557
        %669 = vmatmul.f32.gmra.mxu0 %v590
        %v670 = vpop.f32.mrf.mxu0
        %v671 = vadd.f32 %v651, %v670
        %672 = vdwg.mxu0
        %v675 = vrot.slane %v631, 4
        %v676 = vrot.slane %v671, 4
        %679 = vst [vmem:[#allocation2 + $0x10] sm:$0xf0] %v675
        %680 = vst [vmem:[#allocation2 + $0x18] sm:$0xf0] %v676
        %681 = vmatpush.msra.mxu0 %v554
        %682 = vmatpush.msra.mxu0 %v552
        %683 = vmatpush.msra.mxu0 %v550
        %684 = vmatpush.msra.mxu0 %v548
        %685 = vmatpush.msra.mxu0 %v546
        %686 = vmatpush.msra.mxu0 %v544
        %687 = vmatpush.msra.mxu0 %v542
        %688 = vmatpush.msra.mxu0 %v540
        %689 = vmatpush.msra.mxu0 %v538
        %690 = vmatpush.msra.mxu0 %v536
        %691 = vmatpush.msra.mxu0 %v534
        %692 = vmatpush.msra.mxu0 %v532
        %693 = vmatpush.msra.mxu0 %v530
        %694 = vmatpush.msra.mxu0 %v528
        %695 = vmatpush.msra.mxu0 %v526
        %696 = vmatpush.msra.mxu0 %v524
        %697 = vmatmul.f32.gmra.mxu0 %v631
        %v698 = vpop.f32.mrf.mxu0
        %v699 = vadd.f32 0.0, %v698
        %700 = vdwg.mxu0
        %701 = vmatpush.msra.mxu0 %v586
        %702 = vmatpush.msra.mxu0 %v584
        %703 = vmatpush.msra.mxu0 %v582
        %704 = vmatpush.msra.mxu0 %v580
        %705 = vmatpush.msra.mxu0 %v578
        %706 = vmatpush.msra.mxu0 %v576
        %707 = vmatpush.msra.mxu0 %v574
        %708 = vmatpush.msra.mxu0 %v572
        %709 = vmatpush.msra.mxu0 %v570
        %710 = vmatpush.msra.mxu0 %v568
        %711 = vmatpush.msra.mxu0 %v566
        %712 = vmatpush.msra.mxu0 %v564
        %713 = vmatpush.msra.mxu0 %v562
        %714 = vmatpush.msra.mxu0 %v560
        %715 = vmatpush.msra.mxu0 %v558
        %716 = vmatpush.msra.mxu0 %v556
        %717 = vmatmul.f32.gmra.mxu0 %v671
        %v718 = vpop.f32.mrf.mxu0
        %v719 = vadd.f32 %v699, %v718
        %720 = vdwg.mxu0
        %721 = vmatpush.msra.mxu0 %v555
        %722 = vmatpush.msra.mxu0 %v553
        %723 = vmatpush.msra.mxu0 %v551
        %724 = vmatpush.msra.mxu0 %v549
        %725 = vmatpush.msra.mxu0 %v547
        %726 = vmatpush.msra.mxu0 %v545
        %727 = vmatpush.msra.mxu0 %v543
        %728 = vmatpush.msra.mxu0 %v541
        %729 = vmatpush.msra.mxu0 %v539
        %730 = vmatpush.msra.mxu0 %v537
        %731 = vmatpush.msra.mxu0 %v535
        %732 = vmatpush.msra.mxu0 %v533
        %733 = vmatpush.msra.mxu0 %v531
        %734 = vmatpush.msra.mxu0 %v529
        %735 = vmatpush.msra.mxu0 %v527
        %736 = vmatpush.msra.mxu0 %v525
        %737 = vmatmul.f32.gmra.mxu0 %v631
        %v738 = vpop.f32.mrf.mxu0
        %v739 = vadd.f32 0.0, %v738
        %740 = vdwg.mxu0
        %741 = vmatpush.msra.mxu0 %v587
        %742 = vmatpush.msra.mxu0 %v585
        %743 = vmatpush.msra.mxu0 %v583
        %744 = vmatpush.msra.mxu0 %v581
        %745 = vmatpush.msra.mxu0 %v579
        %746 = vmatpush.msra.mxu0 %v577
        %747 = vmatpush.msra.mxu0 %v575
        %748 = vmatpush.msra.mxu0 %v573
        %749 = vmatpush.msra.mxu0 %v571
        %750 = vmatpush.msra.mxu0 %v569
        %751 = vmatpush.msra.mxu0 %v567
        %752 = vmatpush.msra.mxu0 %v565
        %753 = vmatpush.msra.mxu0 %v563
        %754 = vmatpush.msra.mxu0 %v561
        %755 = vmatpush.msra.mxu0 %v559
        %756 = vmatpush.msra.mxu0 %v557
        %757 = vmatmul.f32.gmra.mxu0 %v671
        %v758 = vpop.f32.mrf.mxu0
        %v759 = vadd.f32 %v739, %v758
        %760 = vdwg.mxu0
        %761 = vst [vmem:[#allocation2 + $0x20] sm:$0xf] %v719
        %762 = vst [vmem:[#allocation2 + $0x28] sm:$0xf] %v759
        %v763 = vld [vmem:[#allocation2] sm:$0xff]
        %v764 = vld [vmem:[#allocation2 + $0x8] sm:$0xff]
        %v765 = vld [vmem:[#allocation2 + $0x10] sm:$0xff]
        %v766 = vld [vmem:[#allocation2 + $0x18] sm:$0xff]
        %v767 = vld [vmem:[#allocation2 + $0x20] sm:$0xf]
        %v768 = vld [vmem:[#allocation2 + $0x28] sm:$0xf]
        %v769 = vld [vmem:[%s3] sm:$0xff]
        %v770 = vld [vmem:[%s4] sm:$0xff]
        %772 = vset.pattern.permute.xlu0 0
        %773 = vperm.xlu0 %772, %v770
        %v774 = vpop.permute.xlu0 %773
        %vm776 = vcmask 162816
        %v778 = vsel %vm776, %v769, 0
        %vm780 = vcmask 1043456
        %v782 = vsel %vm780, %v767, 0
        %v785 = vsel %vm780, %v768, 0
        %787 = vmatpush.msra.mxu0 0.0
        %788 = vmatpush.msra.mxu0 0.0
        %789 = vmatpush.msra.mxu0 0.0
        %790 = vmatpush.msra.mxu0 0.0
        %791 = vmatpush.msra.mxu0 0.0
        %792 = vmatpush.msra.mxu0 0.0
        %793 = vmatpush.msra.mxu0 0.0
        %794 = vmatpush.msra.mxu0 0.0
        %795 = vmatpush.msra.mxu0 0.0
        %796 = vmatpush.msra.mxu0 0.0
        %797 = vmatpush.msra.mxu0 0.0
        %798 = vmatpush.msra.mxu0 0.0
        %799 = vmatpush.msra.mxu0 0.0
        %800 = vmatpush.msra.mxu0 %v782
        %801 = vmatpush.msra.mxu0 %v765
        %802 = vmatpush.msra.mxu0 %v763
        %803 = vmatmul.f32.gmra.mxu0 %v778
        %v804 = vpop.f32.mrf.mxu0
        %v805 = vadd.f32 %v774, %v804
        %806 = vdwg.mxu0
        %807 = vmatpush.msra.mxu0 0.0
        %808 = vmatpush.msra.mxu0 0.0
        %809 = vmatpush.msra.mxu0 0.0
        %810 = vmatpush.msra.mxu0 0.0
        %811 = vmatpush.msra.mxu0 0.0
        %812 = vmatpush.msra.mxu0 0.0
        %813 = vmatpush.msra.mxu0 0.0
        %814 = vmatpush.msra.mxu0 0.0
        %815 = vmatpush.msra.mxu0 0.0
        %816 = vmatpush.msra.mxu0 0.0
        %817 = vmatpush.msra.mxu0 0.0
        %818 = vmatpush.msra.mxu0 0.0
        %819 = vmatpush.msra.mxu0 0.0
        %820 = vmatpush.msra.mxu0 %v785
        %821 = vmatpush.msra.mxu0 %v766
        %822 = vmatpush.msra.mxu0 %v764
        %823 = vmatmul.f32.gmra.mxu0 %v778
        %v824 = vpop.f32.mrf.mxu0
        %v825 = vadd.f32 %v774, %v824
        %826 = vdwg.mxu0
        %827 = vst [vmem:[%s275] sm:$0xff] %v805
        %828 = vst [vmem:[%s275 + $0x8] sm:$0xff] %v825
        %s829 = sand.u32 %s141, 1
        %s830 = scalar_lea.sflag [#allocation5], %s829
        %s831 = sand.u32 %s141, 1
        %s832 = smul.addr %s831, 16
        %s833 = scalar_lea.vmem [#allocation9], %s832
        // Predicated region
        $region53: #{tpu_custom_call.1} parent=39 // pred_check
          %p834 = pneg %p151
        $region54: #{tpu_custom_call.1} parent=39 // pred_check_branch
          %836 = sbr.rel (%p834) target = $region56
        $region55: #{tpu_custom_call.1} parent=39 // pred_region
          %838 = vsyncadd %s830, 0
          %s839 = smul.addr %s23, 2
          %s840 = smul.addr %s839, 8
          %s841 = scalar_lea.hbm %s5, %s840
          %s843 = sshll.u32 %s833, 4
          %s844 = int_to_ptr.vmem [resolvable:$true] %s843
          %s845 = sshll.u32 %s841, 4
          %s846 = int_to_ptr.hbm [resolvable:$true] %s845
          %848 = dma.vmem_to_hbm [thread:$0]  %s844, 256, %s846, %s830
        $region56: #{tpu_custom_call.1} parent=39 // pred_fallthru
          _
      $region40: #{tpu_custom_call.1} parent=5 // pred_fallthru
        _
      %p849 = scmp.le.s32.totalorder 2, %s18
      // Predicated region
      $region57: #{tpu_custom_call.1} parent=5 // pred_check
        %p850 = pneg %p849
      $region58: #{tpu_custom_call.1} parent=5 // pred_check_branch
        %852 = sbr.rel (%p850) target = $region60
      $region59: #{tpu_custom_call.1} parent=5 // pred_region
        %s853 = ssub.s32 %s18, 2
        // Predicated region
        $region61: #{tpu_custom_call.1} parent=59 // pred_check
          %p854 = pneg %p157
        $region62: #{tpu_custom_call.1} parent=59 // pred_check_branch
          %856 = sbr.rel (%p854) target = $region64
        $region63: #{tpu_custom_call.1} parent=59 // pred_region
          %s857 = sand.u32 %s142, 1
          %s858 = scalar_lea.sflag [#allocation5], %s857
          %s859 = sand.u32 %s142, 1
          %s860 = smul.addr %s859, 16
          %s861 = scalar_lea.vmem [#allocation9], %s860
          %863 = dma.done %s858, 256
        $region64: #{tpu_custom_call.1} parent=59 // pred_fallthru
          _
      $region60: #{tpu_custom_call.1} parent=5 // pred_fallthru
        _
    $region6: #{tpu_custom_call.1} parent=1 // loop_footer
      %s22 = sadd.s32 1, %s18
    $region7: #{tpu_custom_call.1} parent=1 // loop_footer_branch
      %17 = sbr.rel target = $region3
    $region8: #{tpu_custom_call.1} parent=1 // loop_exit
      _
    %864 = vsyncpa [#allocation4], 1
    %s865 = scalar_lea.sflag [#allocation4], 1
    %866 = vsyncpa %s865, 1
    %867 = vsyncpa [#allocation7], 1
    %868 = vsyncpa [#allocation5], 1
    %s869 = scalar_lea.sflag [#allocation5], 1
    %870 = vsyncpa %s869, 1

</llo_original>
